<compile_context>
chip_gen: v5e
topology: v5e:2x2
jax: 0.10.0
libtpu: 0.0.40
codegen_flags: <defaults>
</compile_context>

<pallas_src>
import functools

import jax
import jax.numpy as jnp
from jax.experimental import pallas as pl
from jax.experimental.pallas import tpu as pltpu

LANE = 128            # pad every feature dim to a multiple of the lane width
SUBLANE_BF16 = 16     # bf16 packs 16 sublanes per vreg -> batch tile multiple of 16

_HAS_BUFFERED = hasattr(pl, "Buffered")


def _round_up(n, m):
    return ((n + m - 1) // m) * m


def _query_vmem_capacity():
    """Physical VMEM per TensorCore; conservative fallback = v7x (64 MiB)."""
    try:
        return int(pltpu.get_tpu_info().vmem_capacity_bytes)
    except Exception:
        return 64 << 20


_VMEM_CAPACITY = _query_vmem_capacity()


def _resident_spec(shape, single_buffer):
    """BlockSpec for a grid-invariant (weight/bias) operand.

    Constant index_map keeps the tile VMEM-resident across grid steps; with
    single_buffer we also request a 1-deep pipeline (no pointless double
    buffer for an operand that is never re-DMA'd).
    """
    if single_buffer and _HAS_BUFFERED:
        try:
            return pl.BlockSpec(shape, lambda i: (0, 0),
                                pipeline_mode=pl.Buffered(1))
        except TypeError:          # jax build without the pipeline_mode kwarg
            pass
    return pl.BlockSpec(shape, lambda i: (0, 0))


def _make_mlp_kernel(num_layers, compute_dtype):
    """Kernel for `num_layers` Linear layers (ReLU between, none after last)."""

    def kernel(*refs):
        # refs = (x_ref, w0, b0, w1, b1, ..., w_{L-1}, b_{L-1}, out_ref)
        x_ref = refs[0]
        out_ref = refs[-1]
        param_refs = refs[1:-1]

        h = x_ref[...]                      # bf16 activations (cast in wrapper)
        for layer in range(num_layers):
            w_ref = param_refs[2 * layer]
            b_ref = param_refs[2 * layer + 1]
            # bf16 x bf16 -> f32 accumulation on the MXU.
            acc = jnp.dot(h, w_ref[...], preferred_element_type=jnp.float32)
            acc = acc + b_ref[...]          # f32 bias add, broadcast over batch
            if layer < num_layers - 1:
                # Cast-then-ReLU: bit-equivalent to ReLU-then-cast (monotone
                # cast, 0 preserved) but the max runs on bf16 VPU lanes.
                h = jnp.maximum(acc.astype(compute_dtype),
                                jnp.zeros((), compute_dtype))
            else:
                h = acc
        out_ref[...] = h.astype(out_ref.dtype)

    return kernel


def prepare_params(weights, biases):
    """One-time lane padding + bf16 cast of the parameters.

    weights: sequence of [in_i, out_i] f32 arrays (already [in, out], i.e.
             transposed from torch's nn.Linear [out, in] layout).
    biases:  sequence of [out_i] or [1, out_i] f32 arrays.
    Returns (w_padded_bf16, b_padded_f32) tuples consumed by the forward.
    Zero padding keeps the math exact.
    """
    w_ps, b_ps = [], []
    prev_pad = _round_up(weights[0].shape[0], LANE)
    for w, b in zip(weights, biases):
        in_i, out_i = w.shape
        out_p = _round_up(out_i, LANE)
        b2 = jnp.reshape(b, (1, out_i))
        w_ps.append(
            jnp.pad(w, ((0, prev_pad - in_i), (0, out_p - out_i))).astype(jnp.bfloat16))
        b_ps.append(
            jnp.pad(b2, ((0, 0), (0, out_p - out_i))).astype(jnp.float32))
        prev_pad = out_p
    return tuple(w_ps), tuple(b_ps)


@functools.partial(jax.jit,
                   static_argnames=("num_categories", "single_buffer_params"))
def _forward_jit(x, w_padded, b_padded, *, num_categories,
                 single_buffer_params=True):
    """Forward pass of SimpleClassifier on prepared (padded bf16) params.

    x:        [batch, instance_size] f32
    w_padded: tuple of [in_pad_i, out_pad_i] bf16 (from prepare_params)
    b_padded: tuple of [1, out_pad_i]        f32  (from prepare_params)
    returns:  [batch, num_categories] f32 logits
    """
    batch, in_features = x.shape
    num_layers = len(w_padded)
    compute_dtype = jnp.bfloat16

    in_pad = w_padded[0].shape[0]
    out_pads = [w.shape[1] for w in w_padded]
    out_pad_last = out_pads[-1]
    assert in_features <= in_pad and num_categories <= out_pad_last

    # ---- batch tiling: >= 2 tiles when batch allows (v7x dual TC);
    #      max tile size is VMEM-capacity-driven ---------------------------
    max_tile = 512 if _VMEM_CAPACITY >= (100 << 20) else 256   # v5e/v6e vs v7x
    batch_ru = _round_up(batch, SUBLANE_BF16)
    if batch_ru >= 2 * SUBLANE_BF16:
        tb = _round_up(-(-batch_ru // 2), SUBLANE_BF16)
    else:
        tb = batch_ru
    tb = min(tb, max_tile)
    batch_pad = _round_up(batch, tb)
    num_tiles = batch_pad // tb

    # ---- pad + cast activations (cheap; weights were prepared offline) ----
    x_p = jnp.pad(
        x, ((0, batch_pad - batch), (0, in_pad - in_features))
    ).astype(compute_dtype)

    # ---- VMEM budget --------------------------------------------------------
    param_buf = 1 if (single_buffer_params and _HAS_BUFFERED) else 2
    param_bytes = (sum(w.size * w.dtype.itemsize for w in w_padded)
                   + sum(b.size * b.dtype.itemsize for b in b_padded))
    act_bytes = 2 * tb * in_pad * 2              # double-buffered bf16 input tiles
    out_bytes = 2 * tb * out_pad_last * 4        # double-buffered f32 output tiles
    max_w = max([in_pad] + out_pads)
    tmp_bytes = 2 * tb * max_w * (4 + 2)         # live f32 acc + bf16 h temporaries
    needed = param_buf * param_bytes + act_bytes + out_bytes + tmp_bytes
    # TODO(synk): if resident weights grow past ~60% of VMEM (very wide hidden
    # layers), stream the widest layer from HBM (extra grid axis over its N
    # dim or pltpu.emit_pipeline) instead of keeping all weights resident.
    assert needed < _VMEM_CAPACITY, (
        "parameter set too large for the resident-weight kernel on this chip")
    vmem_limit = min(max(int(needed * 1.25) + (4 << 20), 32 << 20),
                     _VMEM_CAPACITY)

    # ---- specs ---------------------------------------------------------------
    kernel = _make_mlp_kernel(num_layers, compute_dtype)

    in_specs = [pl.BlockSpec((tb, in_pad), lambda i: (i, 0))]
    operands = [x_p]
    for w_p, b_p in zip(w_padded, b_padded):
        in_specs.append(_resident_spec(w_p.shape, single_buffer_params))
        in_specs.append(_resident_spec(b_p.shape, single_buffer_params))
        operands.append(w_p)
        operands.append(b_p)

    out_spec = pl.BlockSpec((tb, out_pad_last), lambda i: (i, 0))
    out_shape = jax.ShapeDtypeStruct((batch_pad, out_pad_last), jnp.float32)

    # ---- cost estimate (helps XLA schedule around the custom call) ----------
    k_dims = [in_pad] + out_pads[:-1]
    flops = 2 * batch_pad * sum(k * n for k, n in zip(k_dims, out_pads))
    bytes_accessed = (x_p.size * x_p.dtype.itemsize + param_bytes
                      + batch_pad * out_pad_last * 4)
    cost = pl.CostEstimate(flops=flops, transcendentals=0,
                           bytes_accessed=bytes_accessed)

    out_full = pl.pallas_call(
        kernel,
        out_shape=out_shape,
        grid=(num_tiles,),
        in_specs=in_specs,
        out_specs=out_spec,
        compiler_params=pltpu.CompilerParams(
            dimension_semantics=("parallel",),   # batch tiles are independent
            vmem_limit_bytes=vmem_limit,
        ),
        cost_estimate=cost,
    )(*operands)

    # Strip batch / lane padding outside the kernel.
    return out_full[:batch, :num_categories]


def simple_classifier_forward(x, w_padded, b_padded, *, num_categories):
    """Public entry point: try single-buffered invariant params first, fall
    back to default double-buffering if this jax/Mosaic rejects Buffered(1)."""
    try:
        out = _forward_jit(x, w_padded, b_padded,
                           num_categories=num_categories,
                           single_buffer_params=True)
        return jax.block_until_ready(out)
    except Exception:  # pragma: no cover - stricter lowering path
        out = _forward_jit(x, w_padded, b_padded,
                           num_categories=num_categories,
                           single_buffer_params=False)
        return jax.block_until_ready(out)


def init_params(key, instance_size, hidden_sizes, num_categories):
    """Deterministic init mimicking nn.Linear; weights returned as [in, out]."""
    sizes = [instance_size] + list(hidden_sizes) + [num_categories]
    weights, biases = [], []
    for i in range(len(sizes) - 1):
        fan_in, fan_out = sizes[i], sizes[i + 1]
        key, wk, bk = jax.random.split(key, 3)
        bound = 1.0 / jnp.sqrt(fan_in)
        w = jax.random.uniform(wk, (fan_in, fan_out), jnp.float32, -bound, bound)
        b = jax.random.uniform(bk, (1, fan_out), jnp.float32, -bound, bound)
        weights.append(w)
        biases.append(b)
    return tuple(weights), tuple(biases)


def reference_forward_f32(x, weights, biases):
    """Pure f32 reference (matches the PyTorch module numerics)."""
    h = x
    n = len(weights)
    for i, (w, b) in enumerate(zip(weights, biases)):
        h = h @ w + b
        if i < n - 1:
            h = jnp.maximum(h, 0.0)
    return h


def reference_forward_bf16(x, weights, biases):
    """Reference mirroring the kernel's bf16-operand / f32-accumulate math."""
    h = x.astype(jnp.bfloat16)
    n = len(weights)
    for i, (w, b) in enumerate(zip(weights, biases)):
        acc = jnp.dot(h, w.astype(jnp.bfloat16),
                      preferred_element_type=jnp.float32) + b
        if i < n - 1:
            h = jnp.maximum(acc, 0.0).astype(jnp.bfloat16)
        else:
            h = acc
    return h


if __name__ == "__main__":
    # Small shapes consistent with the module:
    #   categories.instance_size = 32, hidden_sizes = [64, 32], num_categories = 16
    batch = 8
    instance_size = 32
    hidden_sizes = [64, 32]
    num_categories = 16

    key = jax.random.PRNGKey(0)
    key, xk = jax.random.split(key)
    x = jax.random.normal(xk, (batch, instance_size), jnp.float32)

    weights, biases = init_params(key, instance_size, hidden_sizes, num_categories)

    # One-time parameter preparation (lane pad + bf16 cast), outside the
    # per-call forward.
    w_padded, b_padded = prepare_params(weights, biases)

    out = simple_classifier_forward(x, w_padded, b_padded,
                                    num_categories=num_categories)
    out = jax.block_until_ready(out)
    assert out.shape == (batch, num_categories)

    # Exact-ish check vs a reference mirroring the kernel's bf16/f32 math.
    ref_bf16 = reference_forward_bf16(x, weights, biases)
    assert jnp.allclose(out, ref_bf16, atol=1e-3, rtol=1e-3), "mismatch vs bf16 reference"

    # Loose check vs the pure-f32 PyTorch-equivalent reference (bf16 rounding).
    # TODO(synk): keep f32 matmul operands if strict parity with the f32
    # PyTorch module is required instead of bf16-operand / f32-accumulate.
    ref_f32 = reference_forward_f32(x, weights, biases)
    assert jnp.allclose(out, ref_f32, atol=5e-2, rtol=5e-2), "mismatch vs f32 reference"

    print("KERNEL_OK")
</pallas_src>

<mosaic_0001>
module attributes {stable_mosaic.version = 11 : i64} {
  func.func @kernel(%arg0: i32, %arg1: memref<16x128xbf16, #tpu.memory_space<vmem>>, %arg2: memref<128x128xbf16, #tpu.memory_space<vmem>>, %arg3: memref<1x128xf32, #tpu.memory_space<vmem>>, %arg4: memref<128x128xbf16, #tpu.memory_space<vmem>>, %arg5: memref<1x128xf32, #tpu.memory_space<vmem>>, %arg6: memref<128x128xbf16, #tpu.memory_space<vmem>>, %arg7: memref<1x128xf32, #tpu.memory_space<vmem>>, %arg8: memref<16x128xf32, #tpu.memory_space<vmem>>) attributes {dimension_semantics = [#tpu.dimension_semantics<parallel>], iteration_bounds = array<i64: 1>, scalar_prefetch = 0 : i64, scratch_operands = 0 : i64, tpu.core_type = #tpu.core_type<tc>, window_params = [{transform_indices = @transform_0, window_bounds = array<i64: 16, 128>}, {pipeline_mode = #tpu.pipeline_mode<synchronous>, transform_indices = @transform_1, window_bounds = array<i64: 128, 128>}, {pipeline_mode = #tpu.pipeline_mode<synchronous>, transform_indices = @transform_2, window_bounds = array<i64: 1, 128>}, {pipeline_mode = #tpu.pipeline_mode<synchronous>, transform_indices = @transform_3, window_bounds = array<i64: 128, 128>}, {pipeline_mode = #tpu.pipeline_mode<synchronous>, transform_indices = @transform_4, window_bounds = array<i64: 1, 128>}, {pipeline_mode = #tpu.pipeline_mode<synchronous>, transform_indices = @transform_5, window_bounds = array<i64: 128, 128>}, {pipeline_mode = #tpu.pipeline_mode<synchronous>, transform_indices = @transform_6, window_bounds = array<i64: 1, 128>}, {transform_indices = @transform_7, window_bounds = array<i64: 16, 128>}]} {
    %c0 = arith.constant 0 : index
    %c0_0 = arith.constant 0 : index
    %0 = vector.load %arg1[%c0, %c0_0] : memref<16x128xbf16, #tpu.memory_space<vmem>>, vector<16x128xbf16>
    %c0_1 = arith.constant 0 : index
    %c0_2 = arith.constant 0 : index
    %1 = vector.load %arg2[%c0_1, %c0_2] : memref<128x128xbf16, #tpu.memory_space<vmem>>, vector<128x128xbf16>
    %cst = arith.constant dense<0.000000e+00> : vector<16x128xf32>
    %2 = tpu.matmul %0, %1, %cst {dimension_numbers = #tpu.dot_dimension_numbers<[1], [0], [0], [1], [0, 0, 1, 1], [], []>} : vector<16x128xbf16>, vector<128x128xbf16>, vector<16x128xf32> -> vector<16x128xf32>
    %c0_3 = arith.constant 0 : index
    %c0_4 = arith.constant 0 : index
    %3 = vector.load %arg3[%c0_3, %c0_4] : memref<1x128xf32, #tpu.memory_space<vmem>>, vector<1x128xf32>
    %4 = vector.broadcast %3 : vector<1x128xf32> to vector<16x128xf32>
    %5 = arith.addf %2, %4 : vector<16x128xf32>
    %6 = arith.truncf %5 : vector<16x128xf32> to vector<16x128xbf16>
    %cst_5 = arith.constant 0.000000e+00 : bf16
    %7 = vector.broadcast %cst_5 : bf16 to vector<16x128xbf16>
    %8 = arith.maximumf %6, %7 : vector<16x128xbf16>
    %c0_6 = arith.constant 0 : index
    %c0_7 = arith.constant 0 : index
    %9 = vector.load %arg4[%c0_6, %c0_7] : memref<128x128xbf16, #tpu.memory_space<vmem>>, vector<128x128xbf16>
    %cst_8 = arith.constant dense<0.000000e+00> : vector<16x128xf32>
    %10 = tpu.matmul %8, %9, %cst_8 {dimension_numbers = #tpu.dot_dimension_numbers<[1], [0], [0], [1], [0, 0, 1, 1], [], []>} : vector<16x128xbf16>, vector<128x128xbf16>, vector<16x128xf32> -> vector<16x128xf32>
    %c0_9 = arith.constant 0 : index
    %c0_10 = arith.constant 0 : index
    %11 = vector.load %arg5[%c0_9, %c0_10] : memref<1x128xf32, #tpu.memory_space<vmem>>, vector<1x128xf32>
    %12 = vector.broadcast %11 : vector<1x128xf32> to vector<16x128xf32>
    %13 = arith.addf %10, %12 : vector<16x128xf32>
    %14 = arith.truncf %13 : vector<16x128xf32> to vector<16x128xbf16>
    %cst_11 = arith.constant 0.000000e+00 : bf16
    %15 = vector.broadcast %cst_11 : bf16 to vector<16x128xbf16>
    %16 = arith.maximumf %14, %15 : vector<16x128xbf16>
    %c0_12 = arith.constant 0 : index
    %c0_13 = arith.constant 0 : index
    %17 = vector.load %arg6[%c0_12, %c0_13] : memref<128x128xbf16, #tpu.memory_space<vmem>>, vector<128x128xbf16>
    %cst_14 = arith.constant dense<0.000000e+00> : vector<16x128xf32>
    %18 = tpu.matmul %16, %17, %cst_14 {dimension_numbers = #tpu.dot_dimension_numbers<[1], [0], [0], [1], [0, 0, 1, 1], [], []>} : vector<16x128xbf16>, vector<128x128xbf16>, vector<16x128xf32> -> vector<16x128xf32>
    %c0_15 = arith.constant 0 : index
    %c0_16 = arith.constant 0 : index
    %19 = vector.load %arg7[%c0_15, %c0_16] : memref<1x128xf32, #tpu.memory_space<vmem>>, vector<1x128xf32>
    %20 = vector.broadcast %19 : vector<1x128xf32> to vector<16x128xf32>
    %21 = arith.addf %18, %20 : vector<16x128xf32>
    %c0_17 = arith.constant 0 : index
    %c0_18 = arith.constant 0 : index
    %22 = vector.load %arg8[%c0_17, %c0_18] : memref<16x128xf32, #tpu.memory_space<vmem>>, vector<16x128xf32>
    tpu.vector_store %arg8[%c0_17, %c0_18], %21 {strides = array<i32>} : memref<16x128xf32, #tpu.memory_space<vmem>>, vector<16x128xf32>,
    return
  }
  func.func @transform_0(%arg0: i32) -> (i32, i32) {
    %c0_i32 = arith.constant 0 : i32
    %c0_i32_0 = arith.constant 0 : i32
    return %arg0, %c0_i32 : i32, i32
  }
  func.func @transform_1(%arg0: i32) -> (i32, i32) {
    %c0_i32 = arith.constant 0 : i32
    %c0_i32_0 = arith.constant 0 : i32
    %c0_i32_1 = arith.constant 0 : i32
    return %c0_i32, %c0_i32_0 : i32, i32
  }
  func.func @transform_2(%arg0: i32) -> (i32, i32) {
    %c0_i32 = arith.constant 0 : i32
    %c0_i32_0 = arith.constant 0 : i32
    %c0_i32_1 = arith.constant 0 : i32
    return %c0_i32, %c0_i32_0 : i32, i32
  }
  func.func @transform_3(%arg0: i32) -> (i32, i32) {
    %c0_i32 = arith.constant 0 : i32
    %c0_i32_0 = arith.constant 0 : i32
    %c0_i32_1 = arith.constant 0 : i32
    return %c0_i32, %c0_i32_0 : i32, i32
  }
  func.func @transform_4(%arg0: i32) -> (i32, i32) {
    %c0_i32 = arith.constant 0 : i32
    %c0_i32_0 = arith.constant 0 : i32
    %c0_i32_1 = arith.constant 0 : i32
    return %c0_i32, %c0_i32_0 : i32, i32
  }
  func.func @transform_5(%arg0: i32) -> (i32, i32) {
    %c0_i32 = arith.constant 0 : i32
    %c0_i32_0 = arith.constant 0 : i32
    %c0_i32_1 = arith.constant 0 : i32
    return %c0_i32, %c0_i32_0 : i32, i32
  }
  func.func @transform_6(%arg0: i32) -> (i32, i32) {
    %c0_i32 = arith.constant 0 : i32
    %c0_i32_0 = arith.constant 0 : i32
    %c0_i32_1 = arith.constant 0 : i32
    return %c0_i32, %c0_i32_0 : i32, i32
  }
  func.func @transform_7(%arg0: i32) -> (i32, i32) {
    %c0_i32 = arith.constant 0 : i32
    %c0_i32_0 = arith.constant 0 : i32
    return %arg0, %c0_i32 : i32, i32
  }
}

module attributes {stable_mosaic.version = 11 : i64} {
  func.func @kernel(%arg0: i32, %arg1: memref<16x128xbf16, #tpu.memory_space<vmem>>, %arg2: memref<128x128xbf16, #tpu.memory_space<vmem>>, %arg3: memref<1x128xf32, #tpu.memory_space<vmem>>, %arg4: memref<128x128xbf16, #tpu.memory_space<vmem>>, %arg5: memref<1x128xf32, #tpu.memory_space<vmem>>, %arg6: memref<128x128xbf16, #tpu.memory_space<vmem>>, %arg7: memref<1x128xf32, #tpu.memory_space<vmem>>, %arg8: memref<16x128xf32, #tpu.memory_space<vmem>>) attributes {dimension_semantics = [#tpu.dimension_semantics<parallel>], iteration_bounds = array<i64: 1>, scalar_prefetch = 0 : i64, scratch_operands = 0 : i64, tpu.core_type = #tpu.core_type<tc>, window_params = [{transform_indices = @transform_0, window_bounds = array<i64: 16, 128>}, {pipeline_mode = #tpu.pipeline_mode<synchronous>, transform_indices = @transform_1, window_bounds = array<i64: 128, 128>}, {pipeline_mode = #tpu.pipeline_mode<synchronous>, transform_indices = @transform_2, window_bounds = array<i64: 1, 128>}, {pipeline_mode = #tpu.pipeline_mode<synchronous>, transform_indices = @transform_3, window_bounds = array<i64: 128, 128>}, {pipeline_mode = #tpu.pipeline_mode<synchronous>, transform_indices = @transform_4, window_bounds = array<i64: 1, 128>}, {pipeline_mode = #tpu.pipeline_mode<synchronous>, transform_indices = @transform_5, window_bounds = array<i64: 128, 128>}, {pipeline_mode = #tpu.pipeline_mode<synchronous>, transform_indices = @transform_6, window_bounds = array<i64: 1, 128>}, {transform_indices = @transform_7, window_bounds = array<i64: 16, 128>}]} {
    %c0 = arith.constant 0 : index
    %c0_0 = arith.constant 0 : index
    %0 = vector.load %arg1[%c0, %c0_0] : memref<16x128xbf16, #tpu.memory_space<vmem>>, vector<16x128xbf16>
    %c0_1 = arith.constant 0 : index
    %c0_2 = arith.constant 0 : index
    %1 = vector.load %arg2[%c0_1, %c0_2] : memref<128x128xbf16, #tpu.memory_space<vmem>>, vector<128x128xbf16>
    %cst = arith.constant dense<0.000000e+00> : vector<16x128xf32>
    %2 = tpu.matmul %0, %1, %cst {dimension_numbers = #tpu.dot_dimension_numbers<[1], [0], [0], [1], [0, 0, 1, 1], [], []>} : vector<16x128xbf16>, vector<128x128xbf16>, vector<16x128xf32> -> vector<16x128xf32>
    %c0_3 = arith.constant 0 : index
    %c0_4 = arith.constant 0 : index
    %3 = vector.load %arg3[%c0_3, %c0_4] : memref<1x128xf32, #tpu.memory_space<vmem>>, vector<1x128xf32>
    %4 = vector.broadcast %3 : vector<1x128xf32> to vector<16x128xf32>
    %5 = arith.addf %2, %4 : vector<16x128xf32>
    %6 = arith.truncf %5 : vector<16x128xf32> to vector<16x128xbf16>
    %cst_5 = arith.constant 0.000000e+00 : bf16
    %7 = vector.broadcast %cst_5 : bf16 to vector<16x128xbf16>
    %8 = arith.maximumf %6, %7 : vector<16x128xbf16>
    %c0_6 = arith.constant 0 : index
    %c0_7 = arith.constant 0 : index
    %9 = vector.load %arg4[%c0_6, %c0_7] : memref<128x128xbf16, #tpu.memory_space<vmem>>, vector<128x128xbf16>
    %cst_8 = arith.constant dense<0.000000e+00> : vector<16x128xf32>
    %10 = tpu.matmul %8, %9, %cst_8 {dimension_numbers = #tpu.dot_dimension_numbers<[1], [0], [0], [1], [0, 0, 1, 1], [], []>} : vector<16x128xbf16>, vector<128x128xbf16>, vector<16x128xf32> -> vector<16x128xf32>
    %c0_9 = arith.constant 0 : index
    %c0_10 = arith.constant 0 : index
    %11 = vector.load %arg5[%c0_9, %c0_10] : memref<1x128xf32, #tpu.memory_space<vmem>>, vector<1x128xf32>
    %12 = vector.broadcast %11 : vector<1x128xf32> to vector<16x128xf32>
    %13 = arith.addf %10, %12 : vector<16x128xf32>
    %14 = arith.truncf %13 : vector<16x128xf32> to vector<16x128xbf16>
    %cst_11 = arith.constant 0.000000e+00 : bf16
    %15 = vector.broadcast %cst_11 : bf16 to vector<16x128xbf16>
    %16 = arith.maximumf %14, %15 : vector<16x128xbf16>
    %c0_12 = arith.constant 0 : index
    %c0_13 = arith.constant 0 : index
    %17 = vector.load %arg6[%c0_12, %c0_13] : memref<128x128xbf16, #tpu.memory_space<vmem>>, vector<128x128xbf16>
    %cst_14 = arith.constant dense<0.000000e+00> : vector<16x128xf32>
    %18 = tpu.matmul %16, %17, %cst_14 {dimension_numbers = #tpu.dot_dimension_numbers<[1], [0], [0], [1], [0, 0, 1, 1], [], []>} : vector<16x128xbf16>, vector<128x128xbf16>, vector<16x128xf32> -> vector<16x128xf32>
    %c0_15 = arith.constant 0 : index
    %c0_16 = arith.constant 0 : index
    %19 = vector.load %arg7[%c0_15, %c0_16] : memref<1x128xf32, #tpu.memory_space<vmem>>, vector<1x128xf32>
    %20 = vector.broadcast %19 : vector<1x128xf32> to vector<16x128xf32>
    %21 = arith.addf %18, %20 : vector<16x128xf32>
    %c0_17 = arith.constant 0 : index
    %c0_18 = arith.constant 0 : index
    %22 = vector.load %arg8[%c0_17, %c0_18] : memref<16x128xf32, #tpu.memory_space<vmem>>, vector<16x128xf32>
    tpu.vector_store %arg8[%c0_17, %c0_18], %21 {strides = array<i32>} : memref<16x128xf32, #tpu.memory_space<vmem>>, vector<16x128xf32>,
    return
  }
  func.func @transform_0(%arg0: i32) -> (i32, i32) {
    %c0_i32 = arith.constant 0 : i32
    %c0_i32_0 = arith.constant 0 : i32
    return %arg0, %c0_i32 : i32, i32
  }
  func.func @transform_1(%arg0: i32) -> (i32, i32) {
    %c0_i32 = arith.constant 0 : i32
    %c0_i32_0 = arith.constant 0 : i32
    %c0_i32_1 = arith.constant 0 : i32
    return %c0_i32, %c0_i32_0 : i32, i32
  }
  func.func @transform_2(%arg0: i32) -> (i32, i32) {
    %c0_i32 = arith.constant 0 : i32
    %c0_i32_0 = arith.constant 0 : i32
    %c0_i32_1 = arith.constant 0 : i32
    return %c0_i32, %c0_i32_0 : i32, i32
  }
  func.func @transform_3(%arg0: i32) -> (i32, i32) {
    %c0_i32 = arith.constant 0 : i32
    %c0_i32_0 = arith.constant 0 : i32
    %c0_i32_1 = arith.constant 0 : i32
    return %c0_i32, %c0_i32_0 : i32, i32
  }
  func.func @transform_4(%arg0: i32) -> (i32, i32) {
    %c0_i32 = arith.constant 0 : i32
    %c0_i32_0 = arith.constant 0 : i32
    %c0_i32_1 = arith.constant 0 : i32
    return %c0_i32, %c0_i32_0 : i32, i32
  }
  func.func @transform_5(%arg0: i32) -> (i32, i32) {
    %c0_i32 = arith.constant 0 : i32
    %c0_i32_0 = arith.constant 0 : i32
    %c0_i32_1 = arith.constant 0 : i32
    return %c0_i32, %c0_i32_0 : i32, i32
  }
  func.func @transform_6(%arg0: i32) -> (i32, i32) {
    %c0_i32 = arith.constant 0 : i32
    %c0_i32_0 = arith.constant 0 : i32
    %c0_i32_1 = arith.constant 0 : i32
    return %c0_i32, %c0_i32_0 : i32, i32
  }
  func.func @transform_7(%arg0: i32) -> (i32, i32) {
    %c0_i32 = arith.constant 0 : i32
    %c0_i32_0 = arith.constant 0 : i32
    return %arg0, %c0_i32 : i32, i32
  }
}

</mosaic_0001>

<llo_original>
// kernel: _forward_jit.1
$region0: #{_forward_jit.1}
  #allocation0 [shape = 'u32[]', space=smem, size = 0x4, offset = 0x4, fixed_abs, tag = 'smem constant byte address 0x4 - core index']
  #allocation1 [shape = 'u32[72,128]{1,0:T(1,128)}', space=vmem, size = 0x9000, scoped, tag = 'internal scratch']
  %s0 = inlined_call_operand.vmem [shape: bf16[16,128], index: 0, kind: input, shape index: {}]
  %s1 = inlined_call_operand.hbm [shape: bf16[128,128], index: 1, kind: input, shape index: {}]
  %s2 = inlined_call_operand.vmem [shape: f32[1,128], index: 2, kind: input, shape index: {}]
  %s3 = inlined_call_operand.hbm [shape: bf16[128,128], index: 3, kind: input, shape index: {}]
  %s4 = inlined_call_operand.vmem [shape: f32[1,128], index: 4, kind: input, shape index: {}]
  %s5 = inlined_call_operand.hbm [shape: bf16[128,128], index: 5, kind: input, shape index: {}]
  %s6 = inlined_call_operand.vmem [shape: f32[1,128], index: 6, kind: input, shape index: {}]
  %s7 = inlined_call_operand.vmem [shape: f32[16,128], index: 7, kind: output, shape index: {}]
  %s8 = sld [smem:[#allocation0]]
  $region50: #{_forward_jit.1} parent=0
    _
  %s10 = ssub.s32 1, %s8
  %s11 = scalar_select 0, %s10, %s8
  $region1: #{_forward_jit.1} parent=0
    #allocation2 [shape = 'u8[32768]{0}', space=vmem, size = 0x8000, scoped, tag = 'input window, operand 1, single buffered']
    #allocation3 [shape = 's32[1]{0}', space=sflag, size = 0x4, scoped, tag = 'scoped memory for _forward_jit.1']
    #allocation4 [shape = 'u8[32768]{0}', space=vmem, size = 0x8000, scoped, tag = 'input window, operand 3, single buffered']
    #allocation5 [shape = 's32[1]{0}', space=sflag, size = 0x4, scoped, tag = 'scoped memory for _forward_jit.1']
    #allocation6 [shape = 'u8[32768]{0}', space=vmem, size = 0x8000, scoped, tag = 'input window, operand 5, single buffered']
    %12 = vsyncpa [#allocation3], 0
    %13 = vsyncpa [#allocation5], 0
    // Predicated region
    $region2: #{_forward_jit.1} parent=1 // pred_check
      _
    $region3: #{_forward_jit.1} parent=1 // pred_check_branch
      %15 = sbr.rel (0) target = $region5
    $region4: #{_forward_jit.1} parent=1 // pred_region
      _
    $region5: #{_forward_jit.1} parent=1 // pred_fallthru
      _
    // Predicated region
    $region6: #{_forward_jit.1} parent=1 // pred_check
      _
    $region7: #{_forward_jit.1} parent=1 // pred_check_branch
      %17 = sbr.rel (0) target = $region9
    $region8: #{_forward_jit.1} parent=1 // pred_region
      %19 = vsyncadd [#allocation3], 0
      %s20 = sshll.u32 %s1, 4
      %s21 = int_to_ptr.hbm [resolvable:$true] %s20
      %s22 = sshll.u32 [#allocation2], 4
      %s23 = int_to_ptr.vmem [resolvable:$true] %s22
      %28 = dma.hbm_to_vmem [thread:$0]  %s21, 1024, %s23, [#allocation3], 64, 64, 4
    $region9: #{_forward_jit.1} parent=1 // pred_fallthru
      _
    // Predicated region
    $region10: #{_forward_jit.1} parent=1 // pred_check
      _
    $region11: #{_forward_jit.1} parent=1 // pred_check_branch
      %30 = sbr.rel (0) target = $region13
    $region12: #{_forward_jit.1} parent=1 // pred_region
      _
    $region13: #{_forward_jit.1} parent=1 // pred_fallthru
      _
    // Predicated region
    $region14: #{_forward_jit.1} parent=1 // pred_check
      _
    $region15: #{_forward_jit.1} parent=1 // pred_check_branch
      %32 = sbr.rel (0) target = $region17
    $region16: #{_forward_jit.1} parent=1 // pred_region
      %34 = vsyncadd [#allocation5], 0
      %s35 = sshll.u32 %s3, 4
      %s36 = int_to_ptr.hbm [resolvable:$true] %s35
      %s37 = sshll.u32 [#allocation4], 4
      %s38 = int_to_ptr.vmem [resolvable:$true] %s37
      %43 = dma.hbm_to_vmem [thread:$0]  %s36, 1024, %s38, [#allocation5], 64, 64, 4
    $region17: #{_forward_jit.1} parent=1 // pred_fallthru
      _
    // Predicated region
    $region18: #{_forward_jit.1} parent=1 // pred_check
      _
    $region19: #{_forward_jit.1} parent=1 // pred_check_branch
      %45 = sbr.rel (0) target = $region21
    $region20: #{_forward_jit.1} parent=1 // pred_region
      _
    $region21: #{_forward_jit.1} parent=1 // pred_fallthru
      _
    // Predicated region
    $region22: #{_forward_jit.1} parent=1 // pred_check
      _
    $region23: #{_forward_jit.1} parent=1 // pred_check_branch
      %47 = sbr.rel (0) target = $region25
    $region24: #{_forward_jit.1} parent=1 // pred_region
      %49 = vsyncadd [#allocation5], 0
      %s50 = sshll.u32 %s5, 4
      %s51 = int_to_ptr.hbm [resolvable:$true] %s50
      %s52 = sshll.u32 [#allocation6], 4
      %s53 = int_to_ptr.vmem [resolvable:$true] %s52
      %58 = dma.hbm_to_vmem [thread:$0]  %s51, 1024, %s53, [#allocation5], 64, 64, 4
    $region25: #{_forward_jit.1} parent=1 // pred_fallthru
      _
    // Predicated region
    $region26: #{_forward_jit.1} parent=1 // pred_check
      _
    $region27: #{_forward_jit.1} parent=1 // pred_check_branch
      %60 = sbr.rel (0) target = $region29
    $region28: #{_forward_jit.1} parent=1 // pred_region
      _
    $region29: #{_forward_jit.1} parent=1 // pred_fallthru
      _
    // Predicated region
    $region30: #{_forward_jit.1} parent=1 // pred_check
      _
    $region31: #{_forward_jit.1} parent=1 // pred_check_branch
      %62 = sbr.rel (0) target = $region33
    $region32: #{_forward_jit.1} parent=1 // pred_region
      %64 = dma.done [#allocation3], 1024
    $region33: #{_forward_jit.1} parent=1 // pred_fallthru
      _
    // Predicated region
    $region34: #{_forward_jit.1} parent=1 // pred_check
      _
    $region35: #{_forward_jit.1} parent=1 // pred_check_branch
      %66 = sbr.rel (0) target = $region37
    $region36: #{_forward_jit.1} parent=1 // pred_region
      %68 = dma.done [#allocation5], 1024
    $region37: #{_forward_jit.1} parent=1 // pred_fallthru
      _
    // Predicated region
    $region38: #{_forward_jit.1} parent=1 // pred_check
      _
    $region39: #{_forward_jit.1} parent=1 // pred_check_branch
      %70 = sbr.rel (0) target = $region41
    $region40: #{_forward_jit.1} parent=1 // pred_region
      %72 = dma.done [#allocation5], 1024
    $region41: #{_forward_jit.1} parent=1 // pred_fallthru
      _
    %v73 = vld [vmem:[%s0] sm:$0xf]
    %v74 = vld [vmem:[%s0 + $0x4] sm:$0xf]
    %v75 = vld [vmem:[#allocation2] sm:$0xf]
    %v76 = vld [vmem:[#allocation2 + $0x4] sm:$0xf]
    %v77 = vld [vmem:[#allocation2 + $0x8] sm:$0xf]
    %v78 = vld [vmem:[#allocation2 + $0xc] sm:$0xf]
    %v79 = vld [vmem:[#allocation2 + $0x10] sm:$0xf]
    %v80 = vld [vmem:[#allocation2 + $0x14] sm:$0xf]
    %v81 = vld [vmem:[#allocation2 + $0x18] sm:$0xf]
    %v82 = vld [vmem:[#allocation2 + $0x1c] sm:$0xf]
    %v83 = vld [vmem:[#allocation2 + $0x20] sm:$0xf]
    %v84 = vld [vmem:[#allocation2 + $0x24] sm:$0xf]
    %v85 = vld [vmem:[#allocation2 + $0x28] sm:$0xf]
    %v86 = vld [vmem:[#allocation2 + $0x2c] sm:$0xf]
    %v87 = vld [vmem:[#allocation2 + $0x30] sm:$0xf]
    %v88 = vld [vmem:[#allocation2 + $0x34] sm:$0xf]
    %v89 = vld [vmem:[#allocation2 + $0x38] sm:$0xf]
    %v90 = vld [vmem:[#allocation2 + $0x3c] sm:$0xf]
    %v91 = vld [vmem:[%s2] sm:$0x1]
    %v93 = vperm.slane %v91, 0
    %v97 = vunpack.c.l.b16 %v73
    %v98 = vunpack.c.l.b16 %v74
    %v99 = vpack.c.b16 %v98, %v97
    %v117 = vunpack.c.l.b16 %v75
    %v118 = vunpack.c.l.b16 %v76
    %v119 = vunpack.c.l.b16 %v77
    %v120 = vunpack.c.l.b16 %v78
    %v121 = vunpack.c.l.b16 %v79
    %v122 = vunpack.c.l.b16 %v80
    %v123 = vunpack.c.l.b16 %v81
    %v124 = vunpack.c.l.b16 %v82
    %v125 = vunpack.c.l.b16 %v83
    %v126 = vunpack.c.l.b16 %v84
    %v127 = vunpack.c.l.b16 %v85
    %v128 = vunpack.c.l.b16 %v86
    %v129 = vunpack.c.l.b16 %v87
    %v130 = vunpack.c.l.b16 %v88
    %v131 = vunpack.c.l.b16 %v89
    %v132 = vunpack.c.l.b16 %v90
    %v133 = vpack.c.b16 %v118, %v117
    %v134 = vpack.c.b16 %v120, %v119
    %v135 = vpack.c.b16 %v122, %v121
    %v136 = vpack.c.b16 %v124, %v123
    %v137 = vpack.c.b16 %v126, %v125
    %v138 = vpack.c.b16 %v128, %v127
    %v139 = vpack.c.b16 %v130, %v129
    %v140 = vpack.c.b16 %v132, %v131
    %149 = vmatpush.bf16.msra.mxu0 %v140
    %150 = vmatpush.bf16.msra.mxu0 %v139
    %151 = vmatpush.bf16.msra.mxu0 %v138
    %152 = vmatpush.bf16.msra.mxu0 %v137
    %153 = vmatpush.bf16.msra.mxu0 %v136
    %154 = vmatpush.bf16.msra.mxu0 %v135
    %155 = vmatpush.bf16.msra.mxu0 %v134
    %156 = vmatpush.bf16.msra.mxu0 %v133
    %157 = vmatmul.bf16.gmra.mxu0 %v99
    %v158 = vpop.f32.mrf.mxu0
    %v159 = vadd.f32 %v93, %v158
    %v160 = vpop.f32.mrf.mxu0
    %v161 = vadd.f32 %v93, %v160
    %162 = vdwg.mxu0
    %v163 = vpack.c.bf16 %v159, %v159
    %v164 = vpack.c.bf16 %v161, %v161
    %v165 = vunpack.c.l.bf16 %v163
    %v166 = vunpack.c.l.bf16 %v164
    %v167 = vmax.f32 %v165, 0.0
    %v168 = vmax.f32 %v166, 0.0
    %v169 = vpack.c.bf16 %v168, %v167
    %v170 = vld [vmem:[#allocation4] sm:$0xf]
    %v171 = vld [vmem:[#allocation4 + $0x4] sm:$0xf]
    %v172 = vld [vmem:[#allocation4 + $0x8] sm:$0xf]
    %v173 = vld [vmem:[#allocation4 + $0xc] sm:$0xf]
    %v174 = vld [vmem:[#allocation4 + $0x10] sm:$0xf]
    %v175 = vld [vmem:[#allocation4 + $0x14] sm:$0xf]
    %v176 = vld [vmem:[#allocation4 + $0x18] sm:$0xf]
    %v177 = vld [vmem:[#allocation4 + $0x1c] sm:$0xf]
    %v178 = vld [vmem:[#allocation4 + $0x20] sm:$0xf]
    %v179 = vld [vmem:[#allocation4 + $0x24] sm:$0xf]
    %v180 = vld [vmem:[#allocation4 + $0x28] sm:$0xf]
    %v181 = vld [vmem:[#allocation4 + $0x2c] sm:$0xf]
    %v182 = vld [vmem:[#allocation4 + $0x30] sm:$0xf]
    %v183 = vld [vmem:[#allocation4 + $0x34] sm:$0xf]
    %v184 = vld [vmem:[#allocation4 + $0x38] sm:$0xf]
    %v185 = vld [vmem:[#allocation4 + $0x3c] sm:$0xf]
    %v186 = vld [vmem:[%s4] sm:$0x1]
    %v188 = vperm.slane %v186, 0
    %v206 = vunpack.c.l.b16 %v170
    %v207 = vunpack.c.l.b16 %v171
    %v208 = vunpack.c.l.b16 %v172
    %v209 = vunpack.c.l.b16 %v173
    %v210 = vunpack.c.l.b16 %v174
    %v211 = vunpack.c.l.b16 %v175
    %v212 = vunpack.c.l.b16 %v176
    %v213 = vunpack.c.l.b16 %v177
    %v214 = vunpack.c.l.b16 %v178
    %v215 = vunpack.c.l.b16 %v179
    %v216 = vunpack.c.l.b16 %v180
    %v217 = vunpack.c.l.b16 %v181
    %v218 = vunpack.c.l.b16 %v182
    %v219 = vunpack.c.l.b16 %v183
    %v220 = vunpack.c.l.b16 %v184
    %v221 = vunpack.c.l.b16 %v185
    %v222 = vpack.c.b16 %v207, %v206
    %v223 = vpack.c.b16 %v209, %v208
    %v224 = vpack.c.b16 %v211, %v210
    %v225 = vpack.c.b16 %v213, %v212
    %v226 = vpack.c.b16 %v215, %v214
    %v227 = vpack.c.b16 %v217, %v216
    %v228 = vpack.c.b16 %v219, %v218
    %v229 = vpack.c.b16 %v221, %v220
    %238 = vmatpush.bf16.msra.mxu0 %v229
    %239 = vmatpush.bf16.msra.mxu0 %v228
    %240 = vmatpush.bf16.msra.mxu0 %v227
    %241 = vmatpush.bf16.msra.mxu0 %v226
    %242 = vmatpush.bf16.msra.mxu0 %v225
    %243 = vmatpush.bf16.msra.mxu0 %v224
    %244 = vmatpush.bf16.msra.mxu0 %v223
    %245 = vmatpush.bf16.msra.mxu0 %v222
    %246 = vmatmul.bf16.gmra.mxu0 %v169
    %v247 = vpop.f32.mrf.mxu0
    %v248 = vadd.f32 %v188, %v247
    %v249 = vpop.f32.mrf.mxu0
    %v250 = vadd.f32 %v188, %v249
    %251 = vdwg.mxu0
    %v252 = vpack.c.bf16 %v248, %v248
    %v253 = vpack.c.bf16 %v250, %v250
    %v254 = vunpack.c.l.bf16 %v252
    %v255 = vunpack.c.l.bf16 %v253
    %v256 = vmax.f32 %v254, 0.0
    %v257 = vmax.f32 %v255, 0.0
    %v258 = vpack.c.bf16 %v257, %v256
    %v259 = vld [vmem:[#allocation6] sm:$0xf]
    %v260 = vld [vmem:[#allocation6 + $0x4] sm:$0xf]
    %v261 = vld [vmem:[#allocation6 + $0x8] sm:$0xf]
    %v262 = vld [vmem:[#allocation6 + $0xc] sm:$0xf]
    %v263 = vld [vmem:[#allocation6 + $0x10] sm:$0xf]
    %v264 = vld [vmem:[#allocation6 + $0x14] sm:$0xf]
    %v265 = vld [vmem:[#allocation6 + $0x18] sm:$0xf]
    %v266 = vld [vmem:[#allocation6 + $0x1c] sm:$0xf]
    %v267 = vld [vmem:[#allocation6 + $0x20] sm:$0xf]
    %v268 = vld [vmem:[#allocation6 + $0x24] sm:$0xf]
    %v269 = vld [vmem:[#allocation6 + $0x28] sm:$0xf]
    %v270 = vld [vmem:[#allocation6 + $0x2c] sm:$0xf]
    %v271 = vld [vmem:[#allocation6 + $0x30] sm:$0xf]
    %v272 = vld [vmem:[#allocation6 + $0x34] sm:$0xf]
    %v273 = vld [vmem:[#allocation6 + $0x38] sm:$0xf]
    %v274 = vld [vmem:[#allocation6 + $0x3c] sm:$0xf]
    %v275 = vld [vmem:[%s6] sm:$0x1]
    %v277 = vperm.slane %v275, 0
    %v295 = vunpack.c.l.b16 %v259
    %v296 = vunpack.c.l.b16 %v260
    %v297 = vunpack.c.l.b16 %v261
    %v298 = vunpack.c.l.b16 %v262
    %v299 = vunpack.c.l.b16 %v263
    %v300 = vunpack.c.l.b16 %v264
    %v301 = vunpack.c.l.b16 %v265
    %v302 = vunpack.c.l.b16 %v266
    %v303 = vunpack.c.l.b16 %v267
    %v304 = vunpack.c.l.b16 %v268
    %v305 = vunpack.c.l.b16 %v269
    %v306 = vunpack.c.l.b16 %v270
    %v307 = vunpack.c.l.b16 %v271
    %v308 = vunpack.c.l.b16 %v272
    %v309 = vunpack.c.l.b16 %v273
    %v310 = vunpack.c.l.b16 %v274
    %v311 = vpack.c.b16 %v296, %v295
    %v312 = vpack.c.b16 %v298, %v297
    %v313 = vpack.c.b16 %v300, %v299
    %v314 = vpack.c.b16 %v302, %v301
    %v315 = vpack.c.b16 %v304, %v303
    %v316 = vpack.c.b16 %v306, %v305
    %v317 = vpack.c.b16 %v308, %v307
    %v318 = vpack.c.b16 %v310, %v309
    %327 = vmatpush.bf16.msra.mxu0 %v318
    %328 = vmatpush.bf16.msra.mxu0 %v317
    %329 = vmatpush.bf16.msra.mxu0 %v316
    %330 = vmatpush.bf16.msra.mxu0 %v315
    %331 = vmatpush.bf16.msra.mxu0 %v314
    %332 = vmatpush.bf16.msra.mxu0 %v313
    %333 = vmatpush.bf16.msra.mxu0 %v312
    %334 = vmatpush.bf16.msra.mxu0 %v311
    %335 = vmatmul.bf16.gmra.mxu0 %v258
    %v336 = vpop.f32.mrf.mxu0
    %v337 = vadd.f32 %v277, %v336
    %v338 = vpop.f32.mrf.mxu0
    %v339 = vadd.f32 %v277, %v338
    %340 = vdwg.mxu0
    %341 = vst [vmem:[%s7] sm:$0xff] %v337
    %342 = vst [vmem:[%s7 + $0x8] sm:$0xff] %v339
    // Predicated region
    $region42: #{_forward_jit.1} parent=1 // pred_check
      _
    $region43: #{_forward_jit.1} parent=1 // pred_check_branch
      %344 = sbr.rel (0) target = $region45
    $region44: #{_forward_jit.1} parent=1 // pred_region
      _
    $region45: #{_forward_jit.1} parent=1 // pred_fallthru
      _
    // Predicated region
    $region46: #{_forward_jit.1} parent=1 // pred_check
      _
    $region47: #{_forward_jit.1} parent=1 // pred_check_branch
      %346 = sbr.rel (0) target = $region49
    $region48: #{_forward_jit.1} parent=1 // pred_region
      _
    $region49: #{_forward_jit.1} parent=1 // pred_fallthru
      _
    %347 = vsyncpa [#allocation3], 1
    %348 = vsyncpa [#allocation5], 1

// kernel: _forward_jit.1
$region0: #{_forward_jit.1}
  #allocation0 [shape = 'u32[]', space=smem, size = 0x4, offset = 0x4, fixed_abs, tag = 'smem constant byte address 0x4 - core index']
  #allocation1 [shape = 'u32[72,128]{1,0:T(1,128)}', space=vmem, size = 0x9000, scoped, tag = 'internal scratch']
  %s0 = inlined_call_operand.vmem [shape: bf16[16,128], index: 0, kind: input, shape index: {}]
  %s1 = inlined_call_operand.hbm [shape: bf16[128,128], index: 1, kind: input, shape index: {}]
  %s2 = inlined_call_operand.vmem [shape: f32[1,128], index: 2, kind: input, shape index: {}]
  %s3 = inlined_call_operand.hbm [shape: bf16[128,128], index: 3, kind: input, shape index: {}]
  %s4 = inlined_call_operand.vmem [shape: f32[1,128], index: 4, kind: input, shape index: {}]
  %s5 = inlined_call_operand.hbm [shape: bf16[128,128], index: 5, kind: input, shape index: {}]
  %s6 = inlined_call_operand.vmem [shape: f32[1,128], index: 6, kind: input, shape index: {}]
  %s7 = inlined_call_operand.vmem [shape: f32[16,128], index: 7, kind: output, shape index: {}]
  %s8 = sld [smem:[#allocation0]]
  $region50: #{_forward_jit.1} parent=0
    _
  %s10 = ssub.s32 1, %s8
  %s11 = scalar_select 0, %s10, %s8
  $region1: #{_forward_jit.1} parent=0
    #allocation2 [shape = 'u8[32768]{0}', space=vmem, size = 0x8000, scoped, tag = 'input window, operand 1, single buffered']
    #allocation3 [shape = 's32[1]{0}', space=sflag, size = 0x4, scoped, tag = 'scoped memory for _forward_jit.1']
    #allocation4 [shape = 'u8[32768]{0}', space=vmem, size = 0x8000, scoped, tag = 'input window, operand 3, single buffered']
    #allocation5 [shape = 's32[1]{0}', space=sflag, size = 0x4, scoped, tag = 'scoped memory for _forward_jit.1']
    #allocation6 [shape = 'u8[32768]{0}', space=vmem, size = 0x8000, scoped, tag = 'input window, operand 5, single buffered']
    %12 = vsyncpa [#allocation3], 0
    %13 = vsyncpa [#allocation5], 0
    // Predicated region
    $region2: #{_forward_jit.1} parent=1 // pred_check
      _
    $region3: #{_forward_jit.1} parent=1 // pred_check_branch
      %15 = sbr.rel (0) target = $region5
    $region4: #{_forward_jit.1} parent=1 // pred_region
      _
    $region5: #{_forward_jit.1} parent=1 // pred_fallthru
      _
    // Predicated region
    $region6: #{_forward_jit.1} parent=1 // pred_check
      _
    $region7: #{_forward_jit.1} parent=1 // pred_check_branch
      %17 = sbr.rel (0) target = $region9
    $region8: #{_forward_jit.1} parent=1 // pred_region
      %19 = vsyncadd [#allocation3], 0
      %s20 = sshll.u32 %s1, 4
      %s21 = int_to_ptr.hbm [resolvable:$true] %s20
      %s22 = sshll.u32 [#allocation2], 4
      %s23 = int_to_ptr.vmem [resolvable:$true] %s22
      %28 = dma.hbm_to_vmem [thread:$0]  %s21, 1024, %s23, [#allocation3], 64, 64, 4
    $region9: #{_forward_jit.1} parent=1 // pred_fallthru
      _
    // Predicated region
    $region10: #{_forward_jit.1} parent=1 // pred_check
      _
    $region11: #{_forward_jit.1} parent=1 // pred_check_branch
      %30 = sbr.rel (0) target = $region13
    $region12: #{_forward_jit.1} parent=1 // pred_region
      _
    $region13: #{_forward_jit.1} parent=1 // pred_fallthru
      _
    // Predicated region
    $region14: #{_forward_jit.1} parent=1 // pred_check
      _
    $region15: #{_forward_jit.1} parent=1 // pred_check_branch
      %32 = sbr.rel (0) target = $region17
    $region16: #{_forward_jit.1} parent=1 // pred_region
      %34 = vsyncadd [#allocation5], 0
      %s35 = sshll.u32 %s3, 4
      %s36 = int_to_ptr.hbm [resolvable:$true] %s35
      %s37 = sshll.u32 [#allocation4], 4
      %s38 = int_to_ptr.vmem [resolvable:$true] %s37
      %43 = dma.hbm_to_vmem [thread:$0]  %s36, 1024, %s38, [#allocation5], 64, 64, 4
    $region17: #{_forward_jit.1} parent=1 // pred_fallthru
      _
    // Predicated region
    $region18: #{_forward_jit.1} parent=1 // pred_check
      _
    $region19: #{_forward_jit.1} parent=1 // pred_check_branch
      %45 = sbr.rel (0) target = $region21
    $region20: #{_forward_jit.1} parent=1 // pred_region
      _
    $region21: #{_forward_jit.1} parent=1 // pred_fallthru
      _
    // Predicated region
    $region22: #{_forward_jit.1} parent=1 // pred_check
      _
    $region23: #{_forward_jit.1} parent=1 // pred_check_branch
      %47 = sbr.rel (0) target = $region25
    $region24: #{_forward_jit.1} parent=1 // pred_region
      %49 = vsyncadd [#allocation5], 0
      %s50 = sshll.u32 %s5, 4
      %s51 = int_to_ptr.hbm [resolvable:$true] %s50
      %s52 = sshll.u32 [#allocation6], 4
      %s53 = int_to_ptr.vmem [resolvable:$true] %s52
      %58 = dma.hbm_to_vmem [thread:$0]  %s51, 1024, %s53, [#allocation5], 64, 64, 4
    $region25: #{_forward_jit.1} parent=1 // pred_fallthru
      _
    // Predicated region
    $region26: #{_forward_jit.1} parent=1 // pred_check
      _
    $region27: #{_forward_jit.1} parent=1 // pred_check_branch
      %60 = sbr.rel (0) target = $region29
    $region28: #{_forward_jit.1} parent=1 // pred_region
      _
    $region29: #{_forward_jit.1} parent=1 // pred_fallthru
      _
    // Predicated region
    $region30: #{_forward_jit.1} parent=1 // pred_check
      _
    $region31: #{_forward_jit.1} parent=1 // pred_check_branch
      %62 = sbr.rel (0) target = $region33
    $region32: #{_forward_jit.1} parent=1 // pred_region
      %64 = dma.done [#allocation3], 1024
    $region33: #{_forward_jit.1} parent=1 // pred_fallthru
      _
    // Predicated region
    $region34: #{_forward_jit.1} parent=1 // pred_check
      _
    $region35: #{_forward_jit.1} parent=1 // pred_check_branch
      %66 = sbr.rel (0) target = $region37
    $region36: #{_forward_jit.1} parent=1 // pred_region
      %68 = dma.done [#allocation5], 1024
    $region37: #{_forward_jit.1} parent=1 // pred_fallthru
      _
    // Predicated region
    $region38: #{_forward_jit.1} parent=1 // pred_check
      _
    $region39: #{_forward_jit.1} parent=1 // pred_check_branch
      %70 = sbr.rel (0) target = $region41
    $region40: #{_forward_jit.1} parent=1 // pred_region
      %72 = dma.done [#allocation5], 1024
    $region41: #{_forward_jit.1} parent=1 // pred_fallthru
      _
    %v73 = vld [vmem:[%s0] sm:$0xf]
    %v74 = vld [vmem:[%s0 + $0x4] sm:$0xf]
    %v75 = vld [vmem:[#allocation2] sm:$0xf]
    %v76 = vld [vmem:[#allocation2 + $0x4] sm:$0xf]
    %v77 = vld [vmem:[#allocation2 + $0x8] sm:$0xf]
    %v78 = vld [vmem:[#allocation2 + $0xc] sm:$0xf]
    %v79 = vld [vmem:[#allocation2 + $0x10] sm:$0xf]
    %v80 = vld [vmem:[#allocation2 + $0x14] sm:$0xf]
    %v81 = vld [vmem:[#allocation2 + $0x18] sm:$0xf]
    %v82 = vld [vmem:[#allocation2 + $0x1c] sm:$0xf]
    %v83 = vld [vmem:[#allocation2 + $0x20] sm:$0xf]
    %v84 = vld [vmem:[#allocation2 + $0x24] sm:$0xf]
    %v85 = vld [vmem:[#allocation2 + $0x28] sm:$0xf]
    %v86 = vld [vmem:[#allocation2 + $0x2c] sm:$0xf]
    %v87 = vld [vmem:[#allocation2 + $0x30] sm:$0xf]
    %v88 = vld [vmem:[#allocation2 + $0x34] sm:$0xf]
    %v89 = vld [vmem:[#allocation2 + $0x38] sm:$0xf]
    %v90 = vld [vmem:[#allocation2 + $0x3c] sm:$0xf]
    %v91 = vld [vmem:[%s2] sm:$0x1]
    %v93 = vperm.slane %v91, 0
    %v97 = vunpack.c.l.b16 %v73
    %v98 = vunpack.c.l.b16 %v74
    %v99 = vpack.c.b16 %v98, %v97
    %v117 = vunpack.c.l.b16 %v75
    %v118 = vunpack.c.l.b16 %v76
    %v119 = vunpack.c.l.b16 %v77
    %v120 = vunpack.c.l.b16 %v78
    %v121 = vunpack.c.l.b16 %v79
    %v122 = vunpack.c.l.b16 %v80
    %v123 = vunpack.c.l.b16 %v81
    %v124 = vunpack.c.l.b16 %v82
    %v125 = vunpack.c.l.b16 %v83
    %v126 = vunpack.c.l.b16 %v84
    %v127 = vunpack.c.l.b16 %v85
    %v128 = vunpack.c.l.b16 %v86
    %v129 = vunpack.c.l.b16 %v87
    %v130 = vunpack.c.l.b16 %v88
    %v131 = vunpack.c.l.b16 %v89
    %v132 = vunpack.c.l.b16 %v90
    %v133 = vpack.c.b16 %v118, %v117
    %v134 = vpack.c.b16 %v120, %v119
    %v135 = vpack.c.b16 %v122, %v121
    %v136 = vpack.c.b16 %v124, %v123
    %v137 = vpack.c.b16 %v126, %v125
    %v138 = vpack.c.b16 %v128, %v127
    %v139 = vpack.c.b16 %v130, %v129
    %v140 = vpack.c.b16 %v132, %v131
    %149 = vmatpush.bf16.msra.mxu0 %v140
    %150 = vmatpush.bf16.msra.mxu0 %v139
    %151 = vmatpush.bf16.msra.mxu0 %v138
    %152 = vmatpush.bf16.msra.mxu0 %v137
    %153 = vmatpush.bf16.msra.mxu0 %v136
    %154 = vmatpush.bf16.msra.mxu0 %v135
    %155 = vmatpush.bf16.msra.mxu0 %v134
    %156 = vmatpush.bf16.msra.mxu0 %v133
    %157 = vmatmul.bf16.gmra.mxu0 %v99
    %v158 = vpop.f32.mrf.mxu0
    %v159 = vadd.f32 %v93, %v158
    %v160 = vpop.f32.mrf.mxu0
    %v161 = vadd.f32 %v93, %v160
    %162 = vdwg.mxu0
    %v163 = vpack.c.bf16 %v159, %v159
    %v164 = vpack.c.bf16 %v161, %v161
    %v165 = vunpack.c.l.bf16 %v163
    %v166 = vunpack.c.l.bf16 %v164
    %v167 = vmax.f32 %v165, 0.0
    %v168 = vmax.f32 %v166, 0.0
    %v169 = vpack.c.bf16 %v168, %v167
    %v170 = vld [vmem:[#allocation4] sm:$0xf]
    %v171 = vld [vmem:[#allocation4 + $0x4] sm:$0xf]
    %v172 = vld [vmem:[#allocation4 + $0x8] sm:$0xf]
    %v173 = vld [vmem:[#allocation4 + $0xc] sm:$0xf]
    %v174 = vld [vmem:[#allocation4 + $0x10] sm:$0xf]
    %v175 = vld [vmem:[#allocation4 + $0x14] sm:$0xf]
    %v176 = vld [vmem:[#allocation4 + $0x18] sm:$0xf]
    %v177 = vld [vmem:[#allocation4 + $0x1c] sm:$0xf]
    %v178 = vld [vmem:[#allocation4 + $0x20] sm:$0xf]
    %v179 = vld [vmem:[#allocation4 + $0x24] sm:$0xf]
    %v180 = vld [vmem:[#allocation4 + $0x28] sm:$0xf]
    %v181 = vld [vmem:[#allocation4 + $0x2c] sm:$0xf]
    %v182 = vld [vmem:[#allocation4 + $0x30] sm:$0xf]
    %v183 = vld [vmem:[#allocation4 + $0x34] sm:$0xf]
    %v184 = vld [vmem:[#allocation4 + $0x38] sm:$0xf]
    %v185 = vld [vmem:[#allocation4 + $0x3c] sm:$0xf]
    %v186 = vld [vmem:[%s4] sm:$0x1]
    %v188 = vperm.slane %v186, 0
    %v206 = vunpack.c.l.b16 %v170
    %v207 = vunpack.c.l.b16 %v171
    %v208 = vunpack.c.l.b16 %v172
    %v209 = vunpack.c.l.b16 %v173
    %v210 = vunpack.c.l.b16 %v174
    %v211 = vunpack.c.l.b16 %v175
    %v212 = vunpack.c.l.b16 %v176
    %v213 = vunpack.c.l.b16 %v177
    %v214 = vunpack.c.l.b16 %v178
    %v215 = vunpack.c.l.b16 %v179
    %v216 = vunpack.c.l.b16 %v180
    %v217 = vunpack.c.l.b16 %v181
    %v218 = vunpack.c.l.b16 %v182
    %v219 = vunpack.c.l.b16 %v183
    %v220 = vunpack.c.l.b16 %v184
    %v221 = vunpack.c.l.b16 %v185
    %v222 = vpack.c.b16 %v207, %v206
    %v223 = vpack.c.b16 %v209, %v208
    %v224 = vpack.c.b16 %v211, %v210
    %v225 = vpack.c.b16 %v213, %v212
    %v226 = vpack.c.b16 %v215, %v214
    %v227 = vpack.c.b16 %v217, %v216
    %v228 = vpack.c.b16 %v219, %v218
    %v229 = vpack.c.b16 %v221, %v220
    %238 = vmatpush.bf16.msra.mxu0 %v229
    %239 = vmatpush.bf16.msra.mxu0 %v228
    %240 = vmatpush.bf16.msra.mxu0 %v227
    %241 = vmatpush.bf16.msra.mxu0 %v226
    %242 = vmatpush.bf16.msra.mxu0 %v225
    %243 = vmatpush.bf16.msra.mxu0 %v224
    %244 = vmatpush.bf16.msra.mxu0 %v223
    %245 = vmatpush.bf16.msra.mxu0 %v222
    %246 = vmatmul.bf16.gmra.mxu0 %v169
    %v247 = vpop.f32.mrf.mxu0
    %v248 = vadd.f32 %v188, %v247
    %v249 = vpop.f32.mrf.mxu0
    %v250 = vadd.f32 %v188, %v249
    %251 = vdwg.mxu0
    %v252 = vpack.c.bf16 %v248, %v248
    %v253 = vpack.c.bf16 %v250, %v250
    %v254 = vunpack.c.l.bf16 %v252
    %v255 = vunpack.c.l.bf16 %v253
    %v256 = vmax.f32 %v254, 0.0
    %v257 = vmax.f32 %v255, 0.0
    %v258 = vpack.c.bf16 %v257, %v256
    %v259 = vld [vmem:[#allocation6] sm:$0xf]
    %v260 = vld [vmem:[#allocation6 + $0x4] sm:$0xf]
    %v261 = vld [vmem:[#allocation6 + $0x8] sm:$0xf]
    %v262 = vld [vmem:[#allocation6 + $0xc] sm:$0xf]
    %v263 = vld [vmem:[#allocation6 + $0x10] sm:$0xf]
    %v264 = vld [vmem:[#allocation6 + $0x14] sm:$0xf]
    %v265 = vld [vmem:[#allocation6 + $0x18] sm:$0xf]
    %v266 = vld [vmem:[#allocation6 + $0x1c] sm:$0xf]
    %v267 = vld [vmem:[#allocation6 + $0x20] sm:$0xf]
    %v268 = vld [vmem:[#allocation6 + $0x24] sm:$0xf]
    %v269 = vld [vmem:[#allocation6 + $0x28] sm:$0xf]
    %v270 = vld [vmem:[#allocation6 + $0x2c] sm:$0xf]
    %v271 = vld [vmem:[#allocation6 + $0x30] sm:$0xf]
    %v272 = vld [vmem:[#allocation6 + $0x34] sm:$0xf]
    %v273 = vld [vmem:[#allocation6 + $0x38] sm:$0xf]
    %v274 = vld [vmem:[#allocation6 + $0x3c] sm:$0xf]
    %v275 = vld [vmem:[%s6] sm:$0x1]
    %v277 = vperm.slane %v275, 0
    %v295 = vunpack.c.l.b16 %v259
    %v296 = vunpack.c.l.b16 %v260
    %v297 = vunpack.c.l.b16 %v261
    %v298 = vunpack.c.l.b16 %v262
    %v299 = vunpack.c.l.b16 %v263
    %v300 = vunpack.c.l.b16 %v264
    %v301 = vunpack.c.l.b16 %v265
    %v302 = vunpack.c.l.b16 %v266
    %v303 = vunpack.c.l.b16 %v267
    %v304 = vunpack.c.l.b16 %v268
    %v305 = vunpack.c.l.b16 %v269
    %v306 = vunpack.c.l.b16 %v270
    %v307 = vunpack.c.l.b16 %v271
    %v308 = vunpack.c.l.b16 %v272
    %v309 = vunpack.c.l.b16 %v273
    %v310 = vunpack.c.l.b16 %v274
    %v311 = vpack.c.b16 %v296, %v295
    %v312 = vpack.c.b16 %v298, %v297
    %v313 = vpack.c.b16 %v300, %v299
    %v314 = vpack.c.b16 %v302, %v301
    %v315 = vpack.c.b16 %v304, %v303
    %v316 = vpack.c.b16 %v306, %v305
    %v317 = vpack.c.b16 %v308, %v307
    %v318 = vpack.c.b16 %v310, %v309
    %327 = vmatpush.bf16.msra.mxu0 %v318
    %328 = vmatpush.bf16.msra.mxu0 %v317
    %329 = vmatpush.bf16.msra.mxu0 %v316
    %330 = vmatpush.bf16.msra.mxu0 %v315
    %331 = vmatpush.bf16.msra.mxu0 %v314
    %332 = vmatpush.bf16.msra.mxu0 %v313
    %333 = vmatpush.bf16.msra.mxu0 %v312
    %334 = vmatpush.bf16.msra.mxu0 %v311
    %335 = vmatmul.bf16.gmra.mxu0 %v258
    %v336 = vpop.f32.mrf.mxu0
    %v337 = vadd.f32 %v277, %v336
    %v338 = vpop.f32.mrf.mxu0
    %v339 = vadd.f32 %v277, %v338
    %340 = vdwg.mxu0
    %341 = vst [vmem:[%s7] sm:$0xff] %v337
    %342 = vst [vmem:[%s7 + $0x8] sm:$0xff] %v339
    // Predicated region
    $region42: #{_forward_jit.1} parent=1 // pred_check
      _
    $region43: #{_forward_jit.1} parent=1 // pred_check_branch
      %344 = sbr.rel (0) target = $region45
    $region44: #{_forward_jit.1} parent=1 // pred_region
      _
    $region45: #{_forward_jit.1} parent=1 // pred_fallthru
      _
    // Predicated region
    $region46: #{_forward_jit.1} parent=1 // pred_check
      _
    $region47: #{_forward_jit.1} parent=1 // pred_check_branch
      %346 = sbr.rel (0) target = $region49
    $region48: #{_forward_jit.1} parent=1 // pred_region
      _
    $region49: #{_forward_jit.1} parent=1 // pred_fallthru
      _
    %347 = vsyncpa [#allocation3], 1
    %348 = vsyncpa [#allocation5], 1

</llo_original>
